<compile_context>
chip_gen: v5e
topology: v5e:2x2
jax: 0.10.0
libtpu: 0.0.40
codegen_flags: <defaults>
</compile_context>

<pallas_src>
import jax
import jax.numpy as jnp
import numpy as np
from jax.experimental import pallas as pl
from jax.experimental.pallas import tpu as pltpu  # noqa: F401  (no TPU-specific params needed at this size)


# ----------------------------------------------------------------------------
# Fused kernel: 1x1 conv (channel matmul) + bias + ReLU, whole batch in one shot
# ----------------------------------------------------------------------------
def conv1x1_bias_relu_kernel(x_ref, w_ref, b_ref, o_ref):
    # x_ref: (N, Cin, HW)   activations, lane axis = HW (multiple of 128)
    # w_ref: (Cout, Cin)    1x1 conv weight
    # b_ref: (Cout, 1)      bias (broadcast along lanes)
    # o_ref: (N, Cout, HW)
    n_batch = x_ref.shape[0]
    w = w_ref[...].astype(jnp.float32)
    b = b_ref[...].astype(jnp.float32)
    # N is small and static -> fully unrolled; each step is one (Cout,Cin)x(Cin,HW)
    # matmul with f32 accumulation, fused bias + ReLU, unmasked lane-dense store.
    for n in range(n_batch):
        y = jnp.dot(w, x_ref[n].astype(jnp.float32),
                    preferred_element_type=jnp.float32)          # (Cout, HW)
        o_ref[n] = jnp.maximum(y + b, 0.0).astype(o_ref.dtype)


# ----------------------------------------------------------------------------
# Wrapper
# ----------------------------------------------------------------------------
@jax.jit
def outconv_relu_forward(x_nchw, weight, bias):
    """x_nchw: (N, Cin, H, W); weight: (Cout, Cin, 1, 1) [PyTorch layout]; bias: (Cout,)."""
    N, Cin, H, W = x_nchw.shape
    Cout = weight.shape[0]
    HW = H * W

    # Contiguous reshapes only — NCHW flattens directly to (N, Cin, H*W); the
    # (N, Cout, H*W) output reshapes directly back to NCHW. No transposes, no casts.
    x = x_nchw.reshape(N, Cin, HW)
    w = weight.reshape(Cout, Cin)
    b = bias.reshape(Cout, 1)

    bytes_accessed = (x.size * x.dtype.itemsize
                      + w.size * w.dtype.itemsize
                      + b.size * b.dtype.itemsize
                      + N * Cout * HW * x.dtype.itemsize)
    cost = pl.CostEstimate(flops=2 * N * Cout * Cin * HW,
                           transcendentals=0,
                           bytes_accessed=bytes_accessed)

    # Single invocation (no grid): all inputs/outputs are whole-array VMEM blocks,
    # fetched once — no per-step grid overhead, no redundant weight/bias DMAs.
    out = pl.pallas_call(
        conv1x1_bias_relu_kernel,
        out_shape=jax.ShapeDtypeStruct((N, Cout, HW), x.dtype),
        cost_estimate=cost,
    )(x, w, b)
    return out.reshape(N, Cout, H, W)


# Pure-JAX reference (same math, same default matmul precision).
def outconv_relu_ref(x_nchw, weight, bias):
    Cout, Cin = weight.shape[0], weight.shape[1]
    w = weight.reshape(Cout, Cin).astype(jnp.float32)
    y = jnp.einsum("oc,nchw->nohw", w, x_nchw.astype(jnp.float32))
    y = y + bias.astype(jnp.float32)[None, :, None, None]
    return jnp.maximum(y, 0.0)


if __name__ == "__main__":
    in_ch, out_ch = 4, 8
    N, H, W = 2, 16, 16

    key = jax.random.PRNGKey(0)
    kx, kw, kb = jax.random.split(key, 3)
    x = jax.random.normal(kx, (N, in_ch, H, W), jnp.float32)              # NCHW like PyTorch
    weight = 0.2 * jax.random.normal(kw, (out_ch, in_ch, 1, 1), jnp.float32)
    bias = 0.1 * jax.random.normal(kb, (out_ch,), jnp.float32)

    out = jax.block_until_ready(outconv_relu_forward(x, weight, bias))
    ref = jax.block_until_ready(outconv_relu_ref(x, weight, bias))

    assert out.shape == (N, out_ch, H, W), out.shape
    assert np.all(np.isfinite(np.asarray(out)))
    np.testing.assert_allclose(np.asarray(out), np.asarray(ref), rtol=1e-3, atol=1e-3)

    print("KERNEL_OK")
</pallas_src>

<mosaic_0001>
module attributes {stable_mosaic.version = 11 : i64} {
  func.func @conv1x1_bias_relu_kernel(%arg0: memref<2x4x256xf32, #tpu.memory_space<vmem>>, %arg1: memref<8x4xf32, #tpu.memory_space<vmem>>, %arg2: memref<8x1xf32, #tpu.memory_space<vmem>>, %arg3: memref<2x8x256xf32, #tpu.memory_space<vmem>>) attributes {dimension_semantics = [], scalar_prefetch = 0 : i64, scratch_operands = 0 : i64, tpu.core_type = #tpu.core_type<tc>} {
    %c0 = arith.constant 0 : index
    %c0_0 = arith.constant 0 : index
    %0 = vector.load %arg1[%c0, %c0_0] : memref<8x4xf32, #tpu.memory_space<vmem>>, vector<8x4xf32>
    %c0_1 = arith.constant 0 : index
    %c0_2 = arith.constant 0 : index
    %1 = vector.load %arg2[%c0_1, %c0_2] : memref<8x1xf32, #tpu.memory_space<vmem>>, vector<8x1xf32>
    %c0_3 = arith.constant 0 : index
    %c0_4 = arith.constant 0 : index
    %c0_5 = arith.constant 0 : index
    %2 = vector.load %arg0[%c0_3, %c0_4, %c0_5] : memref<2x4x256xf32, #tpu.memory_space<vmem>>, vector<1x4x256xf32>
    %3 = vector.shape_cast %2 : vector<1x4x256xf32> to vector<4x256xf32>
    %cst = arith.constant dense<0.000000e+00> : vector<8x256xf32>
    %4 = tpu.matmul %0, %3, %cst {dimension_numbers = #tpu.dot_dimension_numbers<[1], [0], [0], [1], [0, 0, 1, 1], [], []>} : vector<8x4xf32>, vector<4x256xf32>, vector<8x256xf32> -> vector<8x256xf32>
    %5 = vector.broadcast %1 : vector<8x1xf32> to vector<8x256xf32>
    %6 = arith.addf %4, %5 : vector<8x256xf32>
    %cst_6 = arith.constant 0.000000e+00 : f32
    %7 = vector.broadcast %cst_6 : f32 to vector<8x256xf32>
    %8 = arith.maximumf %6, %7 : vector<8x256xf32>
    %c0_7 = arith.constant 0 : index
    %c0_8 = arith.constant 0 : index
    %c0_9 = arith.constant 0 : index
    %9 = vector.load %arg3[%c0_7, %c0_8, %c0_9] : memref<2x8x256xf32, #tpu.memory_space<vmem>>, vector<1x8x256xf32>
    %10 = vector.shape_cast %9 : vector<1x8x256xf32> to vector<8x256xf32>
    %11 = vector.shape_cast %8 : vector<8x256xf32> to vector<1x8x256xf32>
    tpu.vector_store %arg3[%c0_7, %c0_8, %c0_9], %11 {strides = array<i32>} : memref<2x8x256xf32, #tpu.memory_space<vmem>>, vector<1x8x256xf32>,
    %c1 = arith.constant 1 : index
    %c0_10 = arith.constant 0 : index
    %c0_11 = arith.constant 0 : index
    %12 = vector.load %arg0[%c1, %c0_10, %c0_11] : memref<2x4x256xf32, #tpu.memory_space<vmem>>, vector<1x4x256xf32>
    %13 = vector.shape_cast %12 : vector<1x4x256xf32> to vector<4x256xf32>
    %cst_12 = arith.constant dense<0.000000e+00> : vector<8x256xf32>
    %14 = tpu.matmul %0, %13, %cst_12 {dimension_numbers = #tpu.dot_dimension_numbers<[1], [0], [0], [1], [0, 0, 1, 1], [], []>} : vector<8x4xf32>, vector<4x256xf32>, vector<8x256xf32> -> vector<8x256xf32>
    %15 = vector.broadcast %1 : vector<8x1xf32> to vector<8x256xf32>
    %16 = arith.addf %14, %15 : vector<8x256xf32>
    %cst_13 = arith.constant 0.000000e+00 : f32
    %17 = vector.broadcast %cst_13 : f32 to vector<8x256xf32>
    %18 = arith.maximumf %16, %17 : vector<8x256xf32>
    %c1_14 = arith.constant 1 : index
    %c0_15 = arith.constant 0 : index
    %c0_16 = arith.constant 0 : index
    %19 = vector.load %arg3[%c1_14, %c0_15, %c0_16] : memref<2x8x256xf32, #tpu.memory_space<vmem>>, vector<1x8x256xf32>
    %20 = vector.shape_cast %19 : vector<1x8x256xf32> to vector<8x256xf32>
    %21 = vector.shape_cast %18 : vector<8x256xf32> to vector<1x8x256xf32>
    tpu.vector_store %arg3[%c1_14, %c0_15, %c0_16], %21 {strides = array<i32>} : memref<2x8x256xf32, #tpu.memory_space<vmem>>, vector<1x8x256xf32>,
    return
  }
}

</mosaic_0001>

<llo_original>
// kernel: outconv_relu_forward.1
$region0: #{outconv_relu_forward.1}
  #allocation0 [shape = 'u32[]', space=smem, size = 0x4, offset = 0x4, fixed_abs, tag = 'smem constant byte address 0x4 - core index']
  #allocation1 [shape = 'u32[72,128]{1,0:T(1,128)}', space=vmem, size = 0x9000, scoped, tag = 'internal scratch']
  %s0 = inlined_call_operand.vmem [shape: f32[2,4,256], index: 0, kind: input, shape index: {}]
  %s1 = inlined_call_operand.vmem [shape: f32[8,4], index: 1, kind: input, shape index: {}]
  %s2 = inlined_call_operand.vmem [shape: f32[8,1], index: 2, kind: input, shape index: {}]
  %s3 = inlined_call_operand.vmem [shape: f32[2,8,256], index: 3, kind: output, shape index: {}]
  %s4 = sld [smem:[#allocation0]]
  $region22: #{outconv_relu_forward.1} parent=0
    _
  %s6 = ssub.s32 1, %s4
  %s7 = scalar_select 0, %s6, %s4
  // Predicated region
  $region2: #{outconv_relu_forward.1} parent=0 // pred_check
    _
  $region3: #{outconv_relu_forward.1} parent=0 // pred_check_branch
    %9 = sbr.rel (0) target = $region5
  $region4: #{outconv_relu_forward.1} parent=0 // pred_region
    _
  $region5: #{outconv_relu_forward.1} parent=0 // pred_fallthru
    _
  // Predicated region
  $region6: #{outconv_relu_forward.1} parent=0 // pred_check
    _
  $region7: #{outconv_relu_forward.1} parent=0 // pred_check_branch
    %11 = sbr.rel (0) target = $region9
  $region8: #{outconv_relu_forward.1} parent=0 // pred_region
    _
  $region9: #{outconv_relu_forward.1} parent=0 // pred_fallthru
    _
  // Predicated region
  $region10: #{outconv_relu_forward.1} parent=0 // pred_check
    _
  $region11: #{outconv_relu_forward.1} parent=0 // pred_check_branch
    %13 = sbr.rel (0) target = $region13
  $region12: #{outconv_relu_forward.1} parent=0 // pred_region
    _
  $region13: #{outconv_relu_forward.1} parent=0 // pred_fallthru
    _
  %v14 = vld [vmem:[%s1] sm:$0xff]
  %v15 = vld [vmem:[%s2] sm:$0xff]
  %v16 = vld [vmem:[%s0] sm:$0xff]
  %18 = vset.pattern.permute.xlu0 0
  %19 = vperm.xlu0 %18, %v15
  %v20 = vpop.permute.xlu0 %19
  %23 = vst [vmem:[#allocation1] ss:$2 sm:$0xff] %v16
  %v24 = vld.sshfl [vmem:[#allocation1] sm:$0xff pattern:$0x75316420]
  %v25 = vld.sshfl [vmem:[#allocation1 + $0x8] sm:$0xff pattern:$0x75316420]
  %vm26 = vcmask 31744
  %v28 = vsel %vm26, %v14, 0
  %vm30 = vcmask 1043456
  %v31 = vsel %vm30, %v24, 0
  %v33 = vsel %vm30, %v25, 0
  %35 = vmatpush.msra.mxu0 0.0
  %36 = vmatpush.msra.mxu0 0.0
  %37 = vmatpush.msra.mxu0 0.0
  %38 = vmatpush.msra.mxu0 0.0
  %39 = vmatpush.msra.mxu0 0.0
  %40 = vmatpush.msra.mxu0 0.0
  %41 = vmatpush.msra.mxu0 0.0
  %42 = vmatpush.msra.mxu0 0.0
  %43 = vmatpush.msra.mxu0 0.0
  %44 = vmatpush.msra.mxu0 0.0
  %45 = vmatpush.msra.mxu0 0.0
  %46 = vmatpush.msra.mxu0 0.0
  %47 = vmatpush.msra.mxu0 0.0
  %48 = vmatpush.msra.mxu0 0.0
  %49 = vmatpush.msra.mxu0 0.0
  %50 = vmatpush.msra.mxu0 %v31
  %51 = vmatmul.f32.gmra.mxu0 %v28
  %v52 = vpop.f32.mrf.mxu0
  %v53 = vadd.f32 %v20, %v52
  %54 = vdwg.mxu0
  %55 = vmatpush.msra.mxu0 0.0
  %56 = vmatpush.msra.mxu0 0.0
  %57 = vmatpush.msra.mxu0 0.0
  %58 = vmatpush.msra.mxu0 0.0
  %59 = vmatpush.msra.mxu0 0.0
  %60 = vmatpush.msra.mxu0 0.0
  %61 = vmatpush.msra.mxu0 0.0
  %62 = vmatpush.msra.mxu0 0.0
  %63 = vmatpush.msra.mxu0 0.0
  %64 = vmatpush.msra.mxu0 0.0
  %65 = vmatpush.msra.mxu0 0.0
  %66 = vmatpush.msra.mxu0 0.0
  %67 = vmatpush.msra.mxu0 0.0
  %68 = vmatpush.msra.mxu0 0.0
  %69 = vmatpush.msra.mxu0 0.0
  %70 = vmatpush.msra.mxu0 %v33
  %71 = vmatmul.f32.gmra.mxu0 %v28
  %v72 = vpop.f32.mrf.mxu0
  %v73 = vadd.f32 %v20, %v72
  %74 = vdwg.mxu0
  %v75 = vmax.f32 %v53, 0.0
  %v76 = vmax.f32 %v73, 0.0
  %77 = vst [vmem:[%s3] sm:$0xff] %v75
  %78 = vst [vmem:[%s3 + $0x8] sm:$0xff] %v76
  %s79 = scalar_lea.vmem %s0, 8
  %v80 = vld [vmem:[%s79] sm:$0xff]
  %82 = vst [vmem:[#allocation1] ss:$2 sm:$0xff] %v80
  %v83 = vld.sshfl [vmem:[#allocation1] sm:$0xff pattern:$0x75316420]
  %v84 = vld.sshfl [vmem:[#allocation1 + $0x8] sm:$0xff pattern:$0x75316420]
  %v85 = vsel %vm30, %v83, 0
  %v87 = vsel %vm30, %v84, 0
  %89 = vmatpush.msra.mxu0 0.0
  %90 = vmatpush.msra.mxu0 0.0
  %91 = vmatpush.msra.mxu0 0.0
  %92 = vmatpush.msra.mxu0 0.0
  %93 = vmatpush.msra.mxu0 0.0
  %94 = vmatpush.msra.mxu0 0.0
  %95 = vmatpush.msra.mxu0 0.0
  %96 = vmatpush.msra.mxu0 0.0
  %97 = vmatpush.msra.mxu0 0.0
  %98 = vmatpush.msra.mxu0 0.0
  %99 = vmatpush.msra.mxu0 0.0
  %100 = vmatpush.msra.mxu0 0.0
  %101 = vmatpush.msra.mxu0 0.0
  %102 = vmatpush.msra.mxu0 0.0
  %103 = vmatpush.msra.mxu0 0.0
  %104 = vmatpush.msra.mxu0 %v85
  %105 = vmatmul.f32.gmra.mxu0 %v28
  %v106 = vpop.f32.mrf.mxu0
  %v107 = vadd.f32 %v20, %v106
  %108 = vdwg.mxu0
  %109 = vmatpush.msra.mxu0 0.0
  %110 = vmatpush.msra.mxu0 0.0
  %111 = vmatpush.msra.mxu0 0.0
  %112 = vmatpush.msra.mxu0 0.0
  %113 = vmatpush.msra.mxu0 0.0
  %114 = vmatpush.msra.mxu0 0.0
  %115 = vmatpush.msra.mxu0 0.0
  %116 = vmatpush.msra.mxu0 0.0
  %117 = vmatpush.msra.mxu0 0.0
  %118 = vmatpush.msra.mxu0 0.0
  %119 = vmatpush.msra.mxu0 0.0
  %120 = vmatpush.msra.mxu0 0.0
  %121 = vmatpush.msra.mxu0 0.0
  %122 = vmatpush.msra.mxu0 0.0
  %123 = vmatpush.msra.mxu0 0.0
  %124 = vmatpush.msra.mxu0 %v87
  %125 = vmatmul.f32.gmra.mxu0 %v28
  %v126 = vpop.f32.mrf.mxu0
  %v127 = vadd.f32 %v20, %v126
  %128 = vdwg.mxu0
  %v129 = vmax.f32 %v107, 0.0
  %v130 = vmax.f32 %v127, 0.0
  %s131 = scalar_lea.vmem %s3, 16
  %132 = vst [vmem:[%s131] sm:$0xff] %v129
  %133 = vst [vmem:[%s131 + $0x8] sm:$0xff] %v130
  // Predicated region
  $region14: #{outconv_relu_forward.1} parent=0 // pred_check
    _
  $region15: #{outconv_relu_forward.1} parent=0 // pred_check_branch
    %135 = sbr.rel (0) target = $region17
  $region16: #{outconv_relu_forward.1} parent=0 // pred_region
    _
  $region17: #{outconv_relu_forward.1} parent=0 // pred_fallthru
    _
  // Predicated region
  $region18: #{outconv_relu_forward.1} parent=0 // pred_check
    _
  $region19: #{outconv_relu_forward.1} parent=0 // pred_check_branch
    %137 = sbr.rel (0) target = $region21
  $region20: #{outconv_relu_forward.1} parent=0 // pred_region
    _
  $region21: #{outconv_relu_forward.1} parent=0 // pred_fallthru
    _

</llo_original>
